<compile_context>
chip_gen: v6e
topology: v6e:2x2x1
jax: 0.10.0
libtpu: 0.0.40
codegen_flags: <defaults>
</compile_context>

<pallas_src>
import jax
import jax.numpy as jnp
from jax.experimental import pallas as pl
from jax.experimental.pallas import tpu as pltpu


def _make_se_kernel(inv_hw):
    def _se_kernel(x_ref, wd_ref, bd_ref, wu_ref, bu_ref, o_ref):
        # x_ref:  (R, HW)      R = nb*C rows (nb whole batches, batch-major)
        # wd_ref: (nb*I, R)    block-diagonal "down" weight (f32)
        # bd_ref: (nb*I, 1)    tiled down bias (column, f32)
        # wu_ref: (R, nb*I)    block-diagonal "up" weight (f32)
        # bu_ref: (R, 1)       tiled up bias (column, f32)

        # Squeeze: per-(n, c) spatial mean as f32 sum * static(1/HW).
        pooled = jnp.sum(x_ref[...], axis=-1, keepdims=True,
                         dtype=jnp.float32) * inv_hw                 # (R, 1)

        # Excitation: tiny block-diagonal dense layers; gate stays a column.
        z = jnp.dot(wd_ref[...], pooled,
                    preferred_element_type=jnp.float32) + bd_ref[...]  # (nb*I, 1)
        z = jnp.maximum(z, 0.0)                                         # ReLU
        s = jnp.dot(wu_ref[...], z,
                    preferred_element_type=jnp.float32) + bu_ref[...]   # (R, 1)
        gate = jax.nn.sigmoid(s).astype(o_ref.dtype)                    # (R, 1)

        # Scale: re-read x from VMEM (cheap) and stream the row-scaled tile.
        o_ref[...] = x_ref[...] * gate
    return _se_kernel


def _pick_batches_per_block(n, c, internal, hw, itemsize,
                            x_budget_bytes, w_budget_bytes):
    """Batches per grid step.

    rows = nb*C must be sublane-aligned (multiple of 8 or the full array);
    the streamed x tile (double-buffered in + out ~ 4x) must fit its budget;
    the block-diagonal weights (~ nb^2 * I * C, conservatively 2-buffered)
    must fit theirs.  Pick the biggest nb that fits (biggest tile wins for a
    memory-bound kernel); fall back to the smallest valid nb otherwise.
    """
    total_rows = n * c
    valid = []
    for nb in range(1, n + 1):
        if n % nb:
            continue
        rows = nb * c
        # (8,128) rule: second-to-last block dim must be 8-aligned or full.
        if rows % 8 and rows != total_rows:
            continue
        valid.append(nb)
    # nb == n always qualifies (rows == total_rows), so `valid` is non-empty.

    def x_bytes(nb):  # in tile + out tile, double-buffered
        return 4 * nb * c * hw * itemsize

    def w_bytes(nb):  # wd_bd + wu_bd in f32, assume 2 buffers each
        return 2 * 2 * (nb * internal) * (nb * c) * 4

    fitting = [nb for nb in valid
               if x_bytes(nb) <= x_budget_bytes and w_bytes(nb) <= w_budget_bytes]
    if fitting:
        return max(fitting)
    return min(valid)


def se_block(x, w_down, b_down, w_up, b_up, *,
             x_tile_budget_bytes=16 * 1024 * 1024,
             w_budget_bytes=4 * 1024 * 1024):
    """SEBlock forward.

    Args:
      x:      (N, C, H, W) float, NCHW like the PyTorch module.
      w_down: (I, C, 1, 1) float  (nn.Conv2d weight, kernel_size=1)
      b_down: (I,)         float
      w_up:   (C, I, 1, 1) float
      b_up:   (C,)         float
    Returns:
      (N, C, H, W), same dtype as x.
    """
    N, C, H, W = x.shape
    I = w_down.shape[0]
    HW = H * W
    # TODO(synk): for H*W not a multiple of 128, pad the lane axis in the
    # wrapper to avoid masked partial stores (correct as-is, just slower).

    nb = _pick_batches_per_block(N, C, I, HW, x.dtype.itemsize,
                                 x_tile_budget_bytes, w_budget_bytes)
    rows = nb * C
    grid = (N // nb,)

    # Lane-dense 2-D activation slab: row n*C + c == x[n, c, :, :].
    x2 = x.reshape(N * C, HW)

    # Fold the nb per-batch 1x1 convs into block-diagonal dense layers so the
    # gate is computed entirely as an (R, 1) column (no in-kernel relayout).
    wd = w_down.reshape(I, C).astype(jnp.float32)
    wu = w_up.reshape(C, I).astype(jnp.float32)
    eye = jnp.eye(nb, dtype=jnp.float32)
    wd_bd = jnp.kron(eye, wd)                                    # (nb*I, nb*C)
    wu_bd = jnp.kron(eye, wu)                                    # (nb*C, nb*I)
    bd_col = jnp.tile(b_down.astype(jnp.float32), nb).reshape(nb * I, 1)
    bu_col = jnp.tile(b_up.astype(jnp.float32), nb).reshape(nb * C, 1)

    out = pl.pallas_call(
        _make_se_kernel(1.0 / HW),
        out_shape=jax.ShapeDtypeStruct((N * C, HW), x.dtype),
        grid=grid,
        in_specs=[
            pl.BlockSpec((rows, HW), lambda g: (g, 0)),       # streamed x tile
            pl.BlockSpec((nb * I, rows), lambda g: (0, 0)),   # resident weights
            pl.BlockSpec((nb * I, 1), lambda g: (0, 0)),
            pl.BlockSpec((rows, nb * I), lambda g: (0, 0)),
            pl.BlockSpec((rows, 1), lambda g: (0, 0)),
        ],
        out_specs=pl.BlockSpec((rows, HW), lambda g: (g, 0)),
        compiler_params=pltpu.CompilerParams(
            dimension_semantics=("parallel",),      # megacore-shardable
            vmem_limit_bytes=32 * 1024 * 1024,      # safe on v5e/v6e/v7x
        ),
    )(x2, wd_bd, bd_col, wu_bd, bu_col)

    return out.reshape(N, C, H, W)


def _reference(x, w_down, b_down, w_up, b_up):
    # Pure-JAX reference matching the PyTorch forward.
    pooled = jnp.mean(x.astype(jnp.float32), axis=(2, 3))           # (N, C)
    I, C = w_down.shape[0], w_down.shape[1]
    z = pooled @ w_down.reshape(I, C).T + b_down                    # (N, I)
    z = jnp.maximum(z, 0.0)
    s = z @ w_up.reshape(C, I).T + b_up                             # (N, C)
    s = jax.nn.sigmoid(s)
    return (x * s[:, :, None, None].astype(x.dtype)).astype(x.dtype)


def _run_case(key, N, C, H, W, I, **se_kwargs):
    k_x, k_wd, k_bd, k_wu, k_bu = jax.random.split(key, 5)
    x = jax.random.normal(k_x, (N, C, H, W), dtype=jnp.float32)
    w_down = jax.random.normal(k_wd, (I, C, 1, 1), dtype=jnp.float32) * 0.1
    b_down = jax.random.normal(k_bd, (I,), dtype=jnp.float32) * 0.1
    w_up = jax.random.normal(k_wu, (C, I, 1, 1), dtype=jnp.float32) * 0.1
    b_up = jax.random.normal(k_bu, (C,), dtype=jnp.float32) * 0.1

    out = jax.block_until_ready(se_block(x, w_down, b_down, w_up, b_up,
                                         **se_kwargs))
    ref = _reference(x, w_down, b_down, w_up, b_up)
    assert out.shape == (N, C, H, W)
    assert jnp.allclose(out, ref, atol=1e-5, rtol=1e-5), "mismatch vs reference"


if __name__ == "__main__":
    key = jax.random.PRNGKey(0)
    k0, k1 = jax.random.split(key, 2)

    # Main case (matches the module's assumed small shapes): single grid step.
    _run_case(k0, N=2, C=4, H=16, W=16, I=2)

    # Exercise a multi-step grid (nb < N) by tightening the x-tile budget.
    _run_case(k1, N=4, C=8, H=16, W=16, I=2,
              x_tile_budget_bytes=64 * 1024)

    print("KERNEL_OK")
</pallas_src>

<mosaic_0001>
module attributes {stable_mosaic.version = 11 : i64} {
  func.func @_se_kernel(%arg0: i32, %arg1: memref<8x256xf32, #tpu.memory_space<vmem>>, %arg2: memref<4x8xf32, #tpu.memory_space<vmem>>, %arg3: memref<4x1xf32, #tpu.memory_space<vmem>>, %arg4: memref<8x4xf32, #tpu.memory_space<vmem>>, %arg5: memref<8x1xf32, #tpu.memory_space<vmem>>, %arg6: memref<8x256xf32, #tpu.memory_space<vmem>>) attributes {dimension_semantics = [#tpu.dimension_semantics<parallel>], iteration_bounds = array<i64: 1>, scalar_prefetch = 0 : i64, scratch_operands = 0 : i64, tpu.core_type = #tpu.core_type<tc>, window_params = [{transform_indices = @transform_0, window_bounds = array<i64: 8, 256>}, {pipeline_mode = #tpu.pipeline_mode<synchronous>, transform_indices = @transform_1, window_bounds = array<i64: 4, 8>}, {pipeline_mode = #tpu.pipeline_mode<synchronous>, transform_indices = @transform_2, window_bounds = array<i64: 4, 1>}, {pipeline_mode = #tpu.pipeline_mode<synchronous>, transform_indices = @transform_3, window_bounds = array<i64: 8, 4>}, {pipeline_mode = #tpu.pipeline_mode<synchronous>, transform_indices = @transform_4, window_bounds = array<i64: 8, 1>}, {transform_indices = @transform_5, window_bounds = array<i64: 8, 256>}]} {
    %c0 = arith.constant 0 : index
    %c0_0 = arith.constant 0 : index
    %0 = vector.load %arg1[%c0, %c0_0] : memref<8x256xf32, #tpu.memory_space<vmem>>, vector<8x256xf32>
    %cst = arith.constant dense<0.000000e+00> : vector<8xf32>
    %1 = vector.multi_reduction <add>, %0, %cst [1] : vector<8x256xf32> to vector<8xf32>
    %2 = vector.shape_cast %1 : vector<8xf32> to vector<8x1xf32>
    %cst_1 = arith.constant 3.906250e-03 : f32
    %3 = vector.broadcast %cst_1 : f32 to vector<8x1xf32>
    %4 = arith.mulf %2, %3 : vector<8x1xf32>
    %c0_2 = arith.constant 0 : index
    %c0_3 = arith.constant 0 : index
    %5 = vector.load %arg2[%c0_2, %c0_3] : memref<4x8xf32, #tpu.memory_space<vmem>>, vector<4x8xf32>
    %cst_4 = arith.constant dense<0.000000e+00> : vector<4x1xf32>
    %6 = tpu.matmul %5, %4, %cst_4 {dimension_numbers = #tpu.dot_dimension_numbers<[1], [0], [0], [1], [0, 0, 1, 1], [], []>} : vector<4x8xf32>, vector<8x1xf32>, vector<4x1xf32> -> vector<4x1xf32>
    %c0_5 = arith.constant 0 : index
    %c0_6 = arith.constant 0 : index
    %7 = vector.load %arg3[%c0_5, %c0_6] : memref<4x1xf32, #tpu.memory_space<vmem>>, vector<4x1xf32>
    %8 = arith.addf %6, %7 : vector<4x1xf32>
    %cst_7 = arith.constant 0.000000e+00 : f32
    %9 = vector.broadcast %cst_7 : f32 to vector<4x1xf32>
    %10 = arith.maximumf %8, %9 : vector<4x1xf32>
    %c0_8 = arith.constant 0 : index
    %c0_9 = arith.constant 0 : index
    %11 = vector.load %arg4[%c0_8, %c0_9] : memref<8x4xf32, #tpu.memory_space<vmem>>, vector<8x4xf32>
    %cst_10 = arith.constant dense<0.000000e+00> : vector<8x1xf32>
    %12 = tpu.matmul %11, %10, %cst_10 {dimension_numbers = #tpu.dot_dimension_numbers<[1], [0], [0], [1], [0, 0, 1, 1], [], []>} : vector<8x4xf32>, vector<4x1xf32>, vector<8x1xf32> -> vector<8x1xf32>
    %c0_11 = arith.constant 0 : index
    %c0_12 = arith.constant 0 : index
    %13 = vector.load %arg5[%c0_11, %c0_12] : memref<8x1xf32, #tpu.memory_space<vmem>>, vector<8x1xf32>
    %14 = arith.addf %12, %13 : vector<8x1xf32>
    %15 = arith.negf %14 : vector<8x1xf32>
    %16 = math.exp %15 : vector<8x1xf32>
    %cst_13 = arith.constant 1.000000e+00 : f32
    %17 = vector.broadcast %cst_13 : f32 to vector<8x1xf32>
    %18 = arith.addf %17, %16 : vector<8x1xf32>
    %19 = arith.divf %17, %18 : vector<8x1xf32>
    %c0_14 = arith.constant 0 : index
    %c0_15 = arith.constant 0 : index
    %20 = vector.load %arg1[%c0_14, %c0_15] : memref<8x256xf32, #tpu.memory_space<vmem>>, vector<8x256xf32>
    %21 = vector.broadcast %19 : vector<8x1xf32> to vector<8x256xf32>
    %22 = arith.mulf %20, %21 : vector<8x256xf32>
    %c0_16 = arith.constant 0 : index
    %c0_17 = arith.constant 0 : index
    %23 = vector.load %arg6[%c0_16, %c0_17] : memref<8x256xf32, #tpu.memory_space<vmem>>, vector<8x256xf32>
    tpu.vector_store %arg6[%c0_16, %c0_17], %22 {strides = array<i32>} : memref<8x256xf32, #tpu.memory_space<vmem>>, vector<8x256xf32>,
    return
  }
  func.func @transform_0(%arg0: i32) -> (i32, i32) {
    %c0_i32 = arith.constant 0 : i32
    %c0_i32_0 = arith.constant 0 : i32
    return %arg0, %c0_i32 : i32, i32
  }
  func.func @transform_1(%arg0: i32) -> (i32, i32) {
    %c0_i32 = arith.constant 0 : i32
    %c0_i32_0 = arith.constant 0 : i32
    %c0_i32_1 = arith.constant 0 : i32
    return %c0_i32, %c0_i32_0 : i32, i32
  }
  func.func @transform_2(%arg0: i32) -> (i32, i32) {
    %c0_i32 = arith.constant 0 : i32
    %c0_i32_0 = arith.constant 0 : i32
    %c0_i32_1 = arith.constant 0 : i32
    return %c0_i32, %c0_i32_0 : i32, i32
  }
  func.func @transform_3(%arg0: i32) -> (i32, i32) {
    %c0_i32 = arith.constant 0 : i32
    %c0_i32_0 = arith.constant 0 : i32
    %c0_i32_1 = arith.constant 0 : i32
    return %c0_i32, %c0_i32_0 : i32, i32
  }
  func.func @transform_4(%arg0: i32) -> (i32, i32) {
    %c0_i32 = arith.constant 0 : i32
    %c0_i32_0 = arith.constant 0 : i32
    %c0_i32_1 = arith.constant 0 : i32
    return %c0_i32, %c0_i32_0 : i32, i32
  }
  func.func @transform_5(%arg0: i32) -> (i32, i32) {
    %c0_i32 = arith.constant 0 : i32
    %c0_i32_0 = arith.constant 0 : i32
    return %arg0, %c0_i32 : i32, i32
  }
}

</mosaic_0001>

<llo_original>
// kernel: tpu_custom_call.1
$region0: #{tpu_custom_call.1}
  #allocation0 [shape = 'u32[]', space=smem, size = 0x4, offset = 0x4, fixed_abs, tag = 'smem constant byte address 0x4 - core index']
  #allocation1 [shape = 'u32[144,128]{1,0:T(1,128)}', space=vmem, size = 0x12000, scoped, tag = 'internal scratch']
  %s0 = inlined_call_operand.vmem [shape: f32[8,256], index: 0, kind: input, shape index: {}]
  %s1 = inlined_call_operand.vmem [shape: f32[4,8], index: 1, kind: input, shape index: {}]
  %s2 = inlined_call_operand.vmem [shape: f32[4,1], index: 2, kind: input, shape index: {}]
  %s3 = inlined_call_operand.vmem [shape: f32[8,4], index: 3, kind: input, shape index: {}]
  %s4 = inlined_call_operand.vmem [shape: f32[8,1], index: 4, kind: input, shape index: {}]
  %s5 = inlined_call_operand.hbm [shape: f32[8,256], index: 5, kind: output, shape index: {}]
  %s6 = sld [smem:[#allocation0]]
  $region30: #{tpu_custom_call.1} parent=0
    _
  %s8 = ssub.s32 1, %s6
  %s9 = scalar_select 0, %s8, %s6
  $region1: #{tpu_custom_call.1} parent=0
    #allocation2 [shape = 'u8[8192]{0}', space=vmem, size = 0x2000, scoped, tag = 'output window, operand 0, single buffered']
    #allocation3 [shape = 's32[1]{0}', space=sflag, size = 0x4, scoped, tag = 'scoped memory for tpu_custom_call.1']
    %10 = vsyncpa [#allocation3], 0
    // Predicated region
    $region2: #{tpu_custom_call.1} parent=1 // pred_check
      _
    $region3: #{tpu_custom_call.1} parent=1 // pred_check_branch
      %12 = sbr.rel (0) target = $region5
    $region4: #{tpu_custom_call.1} parent=1 // pred_region
      _
    $region5: #{tpu_custom_call.1} parent=1 // pred_fallthru
      _
    // Predicated region
    $region6: #{tpu_custom_call.1} parent=1 // pred_check
      _
    $region7: #{tpu_custom_call.1} parent=1 // pred_check_branch
      %14 = sbr.rel (0) target = $region9
    $region8: #{tpu_custom_call.1} parent=1 // pred_region
      _
    $region9: #{tpu_custom_call.1} parent=1 // pred_fallthru
      _
    // Predicated region
    $region10: #{tpu_custom_call.1} parent=1 // pred_check
      _
    $region11: #{tpu_custom_call.1} parent=1 // pred_check_branch
      %16 = sbr.rel (0) target = $region13
    $region12: #{tpu_custom_call.1} parent=1 // pred_region
      _
    $region13: #{tpu_custom_call.1} parent=1 // pred_fallthru
      _
    // Predicated region
    $region14: #{tpu_custom_call.1} parent=1 // pred_check
      _
    $region15: #{tpu_custom_call.1} parent=1 // pred_check_branch
      %18 = sbr.rel (0) target = $region17
    $region16: #{tpu_custom_call.1} parent=1 // pred_region
      _
    $region17: #{tpu_custom_call.1} parent=1 // pred_fallthru
      _
    // Predicated region
    $region18: #{tpu_custom_call.1} parent=1 // pred_check
      _
    $region19: #{tpu_custom_call.1} parent=1 // pred_check_branch
      %20 = sbr.rel (0) target = $region21
    $region20: #{tpu_custom_call.1} parent=1 // pred_region
      _
    $region21: #{tpu_custom_call.1} parent=1 // pred_fallthru
      _
    %v21 = vld [vmem:[%s0] sm:$0xff]
    %v22 = vld [vmem:[%s0 + $0x8] sm:$0xff]
    %v23 = vadd.f32 %v21, %v22
    %24 = vadd.xlane.f32.xlu0 %v23
    %v25 = vpop.xlane.xlu0 %24
    %v26 = vmul.f32 %v25, 0.00390625
    %v27 = vld [vmem:[%s1] sm:$0xf]
    %v28 = vld [vmem:[%s2] sm:$0xf]
    %vm29 = vcmask 64512
    %v31 = vsel %vm29, %v27, 0
    %33 = vmatprep.subr.mxu0 0.0
    %34 = vmatpush1.msra.mxu0 0.0
    %35 = vmatprep.subr.mxu0 0.0
    %36 = vmatpush1.msra.mxu0 0.0
    %37 = vmatprep.subr.mxu0 0.0
    %38 = vmatpush1.msra.mxu0 0.0
    %39 = vmatprep.subr.mxu0 0.0
    %40 = vmatpush1.msra.mxu0 0.0
    %41 = vmatprep.subr.mxu0 0.0
    %42 = vmatpush1.msra.mxu0 0.0
    %43 = vmatprep.subr.mxu0 0.0
    %44 = vmatpush1.msra.mxu0 0.0
    %45 = vmatprep.subr.mxu0 0.0
    %46 = vmatpush1.msra.mxu0 0.0
    %47 = vmatprep.subr.mxu0 0.0
    %48 = vmatpush1.msra.mxu0 0.0
    %49 = vmatprep.subr.mxu0 0.0
    %50 = vmatpush1.msra.mxu0 0.0
    %51 = vmatprep.subr.mxu0 0.0
    %52 = vmatpush1.msra.mxu0 0.0
    %53 = vmatprep.subr.mxu0 0.0
    %54 = vmatpush1.msra.mxu0 0.0
    %55 = vmatprep.subr.mxu0 0.0
    %56 = vmatpush1.msra.mxu0 0.0
    %57 = vmatprep.subr.mxu0 0.0
    %58 = vmatpush1.msra.mxu0 0.0
    %59 = vmatprep.subr.mxu0 0.0
    %60 = vmatpush1.msra.mxu0 0.0
    %61 = vmatprep.subr.mxu0 0.0
    %62 = vmatpush1.msra.mxu0 0.0
    %63 = vmatprep.subr.mxu0 0.0
    %64 = vmatpush1.msra.mxu0 %v26
    %65 = vmatprep.subr.mxu0 0.0
    %66 = vmatpush2.msra.mxu0 0.0
    %67 = vmatprep.subr.mxu0 0.0
    %68 = vmatpush2.msra.mxu0 0.0
    %69 = vmatprep.subr.mxu0 0.0
    %70 = vmatpush2.msra.mxu0 0.0
    %71 = vmatprep.subr.mxu0 0.0
    %72 = vmatpush2.msra.mxu0 0.0
    %73 = vmatprep.subr.mxu0 0.0
    %74 = vmatpush2.msra.mxu0 0.0
    %75 = vmatprep.subr.mxu0 0.0
    %76 = vmatpush2.msra.mxu0 0.0
    %77 = vmatprep.subr.mxu0 0.0
    %78 = vmatpush2.msra.mxu0 0.0
    %79 = vmatprep.subr.mxu0 0.0
    %80 = vmatpush2.msra.mxu0 0.0
    %81 = vmatprep.subr.mxu0 0.0
    %82 = vmatpush2.msra.mxu0 0.0
    %83 = vmatprep.subr.mxu0 0.0
    %84 = vmatpush2.msra.mxu0 0.0
    %85 = vmatprep.subr.mxu0 0.0
    %86 = vmatpush2.msra.mxu0 0.0
    %87 = vmatprep.subr.mxu0 0.0
    %88 = vmatpush2.msra.mxu0 0.0
    %89 = vmatprep.subr.mxu0 0.0
    %90 = vmatpush2.msra.mxu0 0.0
    %91 = vmatprep.subr.mxu0 0.0
    %92 = vmatpush2.msra.mxu0 0.0
    %93 = vmatprep.subr.mxu0 0.0
    %94 = vmatpush2.msra.mxu0 0.0
    %95 = vmatprep.subr.mxu0 0.0
    %96 = vmatpush2.msra.mxu0 0.0
    %97 = vmatprep.mubr.f32.mxu0 0.0
    %98 = vmatmul.mubr.f32.gmra.mxu0 %v31
    %v99 = vpop.f32.mrf.mxu0
    %v100 = vadd.f32 %v28, %v99
    %v101 = vpop.f32.mrf.mxu0
    %102 = vdwg.mxu0
    %v103 = vmax.f32 %v100, 0.0
    %v104 = vld [vmem:[%s3] sm:$0xff]
    %v105 = vld [vmem:[%s4] sm:$0xff]
    %vm106 = vcmask 31744
    %v108 = vsel %vm106, %v104, 0
    %vm110 = vcmask 1043456
    %v112 = vsel %vm110, %v103, 0
    %114 = vmatprep.subr.mxu0 0.0
    %115 = vmatpush1.msra.mxu0 0.0
    %116 = vmatprep.subr.mxu0 0.0
    %117 = vmatpush1.msra.mxu0 0.0
    %118 = vmatprep.subr.mxu0 0.0
    %119 = vmatpush1.msra.mxu0 0.0
    %120 = vmatprep.subr.mxu0 0.0
    %121 = vmatpush1.msra.mxu0 0.0
    %122 = vmatprep.subr.mxu0 0.0
    %123 = vmatpush1.msra.mxu0 0.0
    %124 = vmatprep.subr.mxu0 0.0
    %125 = vmatpush1.msra.mxu0 0.0
    %126 = vmatprep.subr.mxu0 0.0
    %127 = vmatpush1.msra.mxu0 0.0
    %128 = vmatprep.subr.mxu0 0.0
    %129 = vmatpush1.msra.mxu0 0.0
    %130 = vmatprep.subr.mxu0 0.0
    %131 = vmatpush1.msra.mxu0 0.0
    %132 = vmatprep.subr.mxu0 0.0
    %133 = vmatpush1.msra.mxu0 0.0
    %134 = vmatprep.subr.mxu0 0.0
    %135 = vmatpush1.msra.mxu0 0.0
    %136 = vmatprep.subr.mxu0 0.0
    %137 = vmatpush1.msra.mxu0 0.0
    %138 = vmatprep.subr.mxu0 0.0
    %139 = vmatpush1.msra.mxu0 0.0
    %140 = vmatprep.subr.mxu0 0.0
    %141 = vmatpush1.msra.mxu0 0.0
    %142 = vmatprep.subr.mxu0 0.0
    %143 = vmatpush1.msra.mxu0 0.0
    %144 = vmatprep.subr.mxu0 0.0
    %145 = vmatpush1.msra.mxu0 %v112
    %146 = vmatprep.subr.mxu0 0.0
    %147 = vmatpush2.msra.mxu0 0.0
    %148 = vmatprep.subr.mxu0 0.0
    %149 = vmatpush2.msra.mxu0 0.0
    %150 = vmatprep.subr.mxu0 0.0
    %151 = vmatpush2.msra.mxu0 0.0
    %152 = vmatprep.subr.mxu0 0.0
    %153 = vmatpush2.msra.mxu0 0.0
    %154 = vmatprep.subr.mxu0 0.0
    %155 = vmatpush2.msra.mxu0 0.0
    %156 = vmatprep.subr.mxu0 0.0
    %157 = vmatpush2.msra.mxu0 0.0
    %158 = vmatprep.subr.mxu0 0.0
    %159 = vmatpush2.msra.mxu0 0.0
    %160 = vmatprep.subr.mxu0 0.0
    %161 = vmatpush2.msra.mxu0 0.0
    %162 = vmatprep.subr.mxu0 0.0
    %163 = vmatpush2.msra.mxu0 0.0
    %164 = vmatprep.subr.mxu0 0.0
    %165 = vmatpush2.msra.mxu0 0.0
    %166 = vmatprep.subr.mxu0 0.0
    %167 = vmatpush2.msra.mxu0 0.0
    %168 = vmatprep.subr.mxu0 0.0
    %169 = vmatpush2.msra.mxu0 0.0
    %170 = vmatprep.subr.mxu0 0.0
    %171 = vmatpush2.msra.mxu0 0.0
    %172 = vmatprep.subr.mxu0 0.0
    %173 = vmatpush2.msra.mxu0 0.0
    %174 = vmatprep.subr.mxu0 0.0
    %175 = vmatpush2.msra.mxu0 0.0
    %176 = vmatprep.subr.mxu0 0.0
    %177 = vmatpush2.msra.mxu0 0.0
    %178 = vmatprep.mubr.f32.mxu0 0.0
    %179 = vmatmul.mubr.f32.gmra.mxu0 %v108
    %v180 = vpop.f32.mrf.mxu0
    %v181 = vadd.f32 %v105, %v180
    %v182 = vpop.f32.mrf.mxu0
    %183 = vdwg.mxu0
    %v184 = vxor.u32 %v181, 2147483648
    %v185 = vmul.f32 %v184, 1.442695
    %v186 = vpow.pop %v185
    %v187 = vadd.f32 %v186, 1.0
    %v188 = vrcp.pop %v187
    %v189 = vmul.f32 1.0, %v188
    %191 = vset.pattern.permute.xlu0 0
    %192 = vperm.xlu0 %191, %v189
    %v193 = vpop.permute.xlu0 %192
    %v195 = vmul.f32 %v21, %v193
    %v196 = vmul.f32 %v22, %v193
    %197 = vst [vmem:[#allocation2] sm:$0xff] %v195
    %198 = vst [vmem:[#allocation2 + $0x8] sm:$0xff] %v196
    // Predicated region
    $region22: #{tpu_custom_call.1} parent=1 // pred_check
      _
    $region23: #{tpu_custom_call.1} parent=1 // pred_check_branch
      %200 = sbr.rel (0) target = $region25
    $region24: #{tpu_custom_call.1} parent=1 // pred_region
      %s202 = ssub.s32 256, 256
      %203 = vsyncadd [#allocation3], %s202
      %s205 = sshll.u32 [#allocation2], 4
      %s206 = int_to_ptr.vmem [resolvable:$true] %s205
      %208 = dma.vmem_to_hbm [thread:$0]  %s206, 256, %s5, [#allocation3]
    $region25: #{tpu_custom_call.1} parent=1 // pred_fallthru
      _
    // Predicated region
    $region26: #{tpu_custom_call.1} parent=1 // pred_check
      _
    $region27: #{tpu_custom_call.1} parent=1 // pred_check_branch
      %210 = sbr.rel (0) target = $region29
    $region28: #{tpu_custom_call.1} parent=1 // pred_region
      %211 = dma.done [#allocation3], 256
    $region29: #{tpu_custom_call.1} parent=1 // pred_fallthru
      _
    %212 = vsyncpa [#allocation3], 1

</llo_original>
